<compile_context>
chip_gen: v6e
topology: v6e:2x2x1
jax: 0.10.0
libtpu: 0.0.40
codegen_flags: <defaults>
</compile_context>

<pallas_src>
import functools

import jax
import jax.numpy as jnp
from jax.experimental import pallas as pl
from jax.experimental.pallas import tpu as pltpu

N_ACTIONS = 4   # len(ACTIONS) in the reference module
LANE = 128      # TPU lane width
SUBLANE = 8     # f32 sublane count


def _round_up(n: int, m: int) -> int:
    return ((n + m - 1) // m) * m


# ----------------------------------------------------------------------------
# Kernel: one batch tile, all three layers fused, everything resident in VMEM.
# ----------------------------------------------------------------------------
def qnetwork_kernel(x_ref, w_ref, b_ref, o_ref):
    x = x_ref[...]                                     # (TILE_B, D)
    # Layer 1: Linear + Tanh
    h1 = jnp.tanh(
        jnp.dot(x, w_ref[0], preferred_element_type=jnp.float32) + b_ref[0]
    )
    # Layer 2: Linear + Tanh
    h2 = jnp.tanh(
        jnp.dot(h1, w_ref[1], preferred_element_type=jnp.float32) + b_ref[1]
    )
    # Layer 3: Linear (Q-values live in the first N_ACTIONS lanes)
    q = jnp.dot(h2, w_ref[2], preferred_element_type=jnp.float32) + b_ref[2]
    o_ref[...] = q.astype(o_ref.dtype)


# ----------------------------------------------------------------------------
# Parameter packing: 3 weights -> (3, D, D), 3 biases -> (3, 1, D), zero padded
# to a lane-dense D (multiple of 128).  Done once, outside the hot path.
# ----------------------------------------------------------------------------
def pack_params(params):
    dims = [
        params["w1"].shape[0], params["w1"].shape[1],
        params["w2"].shape[1], params["w3"].shape[1],
    ]
    D = _round_up(max(dims), LANE)

    def pad_w(w):
        return jnp.zeros((D, D), jnp.float32).at[: w.shape[0], : w.shape[1]].set(w)

    def pad_b(b):
        b = jnp.asarray(b, jnp.float32).reshape(1, -1)
        return jnp.zeros((1, D), jnp.float32).at[:, : b.shape[1]].set(b)

    w_packed = jnp.stack([pad_w(params["w1"]), pad_w(params["w2"]), pad_w(params["w3"])])
    b_packed = jnp.stack([pad_b(params["b1"]), pad_b(params["b2"]), pad_b(params["b3"])])
    return w_packed, b_packed


# ----------------------------------------------------------------------------
# Forward wrapper: pad batch + features, run the batch-tiled kernel, slice back.
# ----------------------------------------------------------------------------
@functools.partial(jax.jit, static_argnames=("n_actions", "tile_b"))
def qnetwork_forward(x, w_packed, b_packed, *, n_actions=N_ACTIONS, tile_b=None):
    batch, in_features = x.shape
    D = w_packed.shape[-1]

    # Batch tile: multiple of 8 sublanes, capped at 256 (MXU-friendly on
    # v6e/v7x; 128-divisible so it is also fine on v5e).
    if tile_b is None:
        tile_b = min(256, _round_up(batch, SUBLANE))
    padded_batch = _round_up(max(batch, tile_b), tile_b)

    # Lane-dense, zero-padded input (extra rows/cols contribute exact zeros).
    x_pad = jnp.zeros((padded_batch, D), jnp.float32).at[:batch, :in_features].set(x)

    grid = (padded_batch // tile_b,)

    cost = pl.CostEstimate(
        flops=2 * padded_batch * 3 * D * D,          # 3 padded D x D matmuls
        transcendentals=2 * padded_batch * D,        # 2 tanh layers
        bytes_accessed=4 * (x_pad.size + w_packed.size + b_packed.size
                            + padded_batch * D),
    )

    out = pl.pallas_call(
        qnetwork_kernel,
        out_shape=jax.ShapeDtypeStruct((padded_batch, D), jnp.float32),
        grid=grid,
        in_specs=[
            pl.BlockSpec((tile_b, D), lambda i: (i, 0)),     # x: tiled over batch
            pl.BlockSpec((3, D, D), lambda i: (0, 0, 0)),    # packed weights (resident)
            pl.BlockSpec((3, 1, D), lambda i: (0, 0, 0)),    # packed biases (resident)
        ],
        out_specs=pl.BlockSpec((tile_b, D), lambda i: (i, 0)),
        compiler_params=pltpu.CompilerParams(
            dimension_semantics=("parallel",),
        ),
        cost_estimate=cost,
    )(x_pad, w_packed, b_packed)

    # Drop batch/feature padding outside the kernel (cheap XLA slice).
    return out[:batch, :n_actions]


# ----------------------------------------------------------------------------
# Deterministic parameter init (shapes match the nn.Linear layers, stored as
# (in, out) = transpose of PyTorch's (out, in) layout so the kernel does x @ W).
# ----------------------------------------------------------------------------
def init_params(key, input_size, hidden_size):
    k1, k2, k3, k4, k5, k6 = jax.random.split(key, 6)
    s1 = 1.0 / jnp.sqrt(input_size)
    s2 = 1.0 / jnp.sqrt(hidden_size)
    return {
        "w1": jax.random.uniform(k1, (input_size, hidden_size), jnp.float32, -s1, s1),
        "b1": jax.random.uniform(k2, (hidden_size,), jnp.float32, -s1, s1),
        "w2": jax.random.uniform(k3, (hidden_size, hidden_size), jnp.float32, -s2, s2),
        "b2": jax.random.uniform(k4, (hidden_size,), jnp.float32, -s2, s2),
        "w3": jax.random.uniform(k5, (hidden_size, N_ACTIONS), jnp.float32, -s2, s2),
        "b3": jax.random.uniform(k6, (N_ACTIONS,), jnp.float32, -s2, s2),
    }


def reference_forward(x, params):
    """Pure-JAX reference of the same forward pass (unpadded)."""
    h1 = jnp.tanh(x @ params["w1"] + params["b1"])
    h2 = jnp.tanh(h1 @ params["w2"] + params["b2"])
    return h2 @ params["w3"] + params["b3"]


if __name__ == "__main__":
    key = jax.random.PRNGKey(0)
    key_x, key_p = jax.random.split(key)

    batch = 8
    input_size = 16     # flattened grid-state features for the DQN
    hidden_size = 128   # matches the module's default hidden_size=128

    x = jax.random.normal(key_x, (batch, input_size), dtype=jnp.float32)
    params = init_params(key_p, input_size, hidden_size)
    w_packed, b_packed = pack_params(params)

    q_vals = qnetwork_forward(x, w_packed, b_packed)
    q_vals = jax.block_until_ready(q_vals)

    q_ref = reference_forward(x, params)
    assert q_vals.shape == (batch, N_ACTIONS)
    assert jnp.allclose(q_vals, q_ref, atol=1e-4, rtol=1e-5), float(
        jnp.max(jnp.abs(q_vals - q_ref))
    )

    print("KERNEL_OK")
</pallas_src>

<mosaic_0001>
module attributes {stable_mosaic.version = 11 : i64} {
  func.func @qnetwork_kernel(%arg0: i32, %arg1: memref<8x128xf32, #tpu.memory_space<vmem>>, %arg2: memref<3x128x128xf32, #tpu.memory_space<vmem>>, %arg3: memref<3x1x128xf32, #tpu.memory_space<vmem>>, %arg4: memref<8x128xf32, #tpu.memory_space<vmem>>) attributes {dimension_semantics = [#tpu.dimension_semantics<parallel>], iteration_bounds = array<i64: 1>, scalar_prefetch = 0 : i64, scratch_operands = 0 : i64, tpu.core_type = #tpu.core_type<tc>, window_params = [{transform_indices = @transform_0, window_bounds = array<i64: 8, 128>}, {pipeline_mode = #tpu.pipeline_mode<synchronous>, transform_indices = @transform_1, window_bounds = array<i64: 3, 128, 128>}, {pipeline_mode = #tpu.pipeline_mode<synchronous>, transform_indices = @transform_2, window_bounds = array<i64: 3, 1, 128>}, {transform_indices = @transform_3, window_bounds = array<i64: 8, 128>}]} {
    %c0 = arith.constant 0 : index
    %c0_0 = arith.constant 0 : index
    %0 = vector.load %arg1[%c0, %c0_0] : memref<8x128xf32, #tpu.memory_space<vmem>>, vector<8x128xf32>
    %c0_1 = arith.constant 0 : index
    %c0_2 = arith.constant 0 : index
    %c0_3 = arith.constant 0 : index
    %1 = vector.load %arg2[%c0_1, %c0_2, %c0_3] : memref<3x128x128xf32, #tpu.memory_space<vmem>>, vector<1x128x128xf32>
    %2 = vector.shape_cast %1 : vector<1x128x128xf32> to vector<128x128xf32>
    %cst = arith.constant dense<0.000000e+00> : vector<8x128xf32>
    %3 = tpu.matmul %0, %2, %cst {dimension_numbers = #tpu.dot_dimension_numbers<[1], [0], [0], [1], [0, 0, 1, 1], [], []>} : vector<8x128xf32>, vector<128x128xf32>, vector<8x128xf32> -> vector<8x128xf32>
    %c0_4 = arith.constant 0 : index
    %c0_5 = arith.constant 0 : index
    %c0_6 = arith.constant 0 : index
    %4 = vector.load %arg3[%c0_4, %c0_5, %c0_6] : memref<3x1x128xf32, #tpu.memory_space<vmem>>, vector<1x1x128xf32>
    %5 = vector.shape_cast %4 : vector<1x1x128xf32> to vector<1x128xf32>
    %6 = vector.broadcast %5 : vector<1x128xf32> to vector<8x128xf32>
    %7 = arith.addf %3, %6 : vector<8x128xf32>
    %8 = math.tanh %7 : vector<8x128xf32>
    %c1 = arith.constant 1 : index
    %c0_7 = arith.constant 0 : index
    %c0_8 = arith.constant 0 : index
    %9 = vector.load %arg2[%c1, %c0_7, %c0_8] : memref<3x128x128xf32, #tpu.memory_space<vmem>>, vector<1x128x128xf32>
    %10 = vector.shape_cast %9 : vector<1x128x128xf32> to vector<128x128xf32>
    %cst_9 = arith.constant dense<0.000000e+00> : vector<8x128xf32>
    %11 = tpu.matmul %8, %10, %cst_9 {dimension_numbers = #tpu.dot_dimension_numbers<[1], [0], [0], [1], [0, 0, 1, 1], [], []>} : vector<8x128xf32>, vector<128x128xf32>, vector<8x128xf32> -> vector<8x128xf32>
    %c1_10 = arith.constant 1 : index
    %c0_11 = arith.constant 0 : index
    %c0_12 = arith.constant 0 : index
    %12 = vector.load %arg3[%c1_10, %c0_11, %c0_12] : memref<3x1x128xf32, #tpu.memory_space<vmem>>, vector<1x1x128xf32>
    %13 = vector.shape_cast %12 : vector<1x1x128xf32> to vector<1x128xf32>
    %14 = vector.broadcast %13 : vector<1x128xf32> to vector<8x128xf32>
    %15 = arith.addf %11, %14 : vector<8x128xf32>
    %16 = math.tanh %15 : vector<8x128xf32>
    %c2 = arith.constant 2 : index
    %c0_13 = arith.constant 0 : index
    %c0_14 = arith.constant 0 : index
    %17 = vector.load %arg2[%c2, %c0_13, %c0_14] : memref<3x128x128xf32, #tpu.memory_space<vmem>>, vector<1x128x128xf32>
    %18 = vector.shape_cast %17 : vector<1x128x128xf32> to vector<128x128xf32>
    %cst_15 = arith.constant dense<0.000000e+00> : vector<8x128xf32>
    %19 = tpu.matmul %16, %18, %cst_15 {dimension_numbers = #tpu.dot_dimension_numbers<[1], [0], [0], [1], [0, 0, 1, 1], [], []>} : vector<8x128xf32>, vector<128x128xf32>, vector<8x128xf32> -> vector<8x128xf32>
    %c2_16 = arith.constant 2 : index
    %c0_17 = arith.constant 0 : index
    %c0_18 = arith.constant 0 : index
    %20 = vector.load %arg3[%c2_16, %c0_17, %c0_18] : memref<3x1x128xf32, #tpu.memory_space<vmem>>, vector<1x1x128xf32>
    %21 = vector.shape_cast %20 : vector<1x1x128xf32> to vector<1x128xf32>
    %22 = vector.broadcast %21 : vector<1x128xf32> to vector<8x128xf32>
    %23 = arith.addf %19, %22 : vector<8x128xf32>
    %c0_19 = arith.constant 0 : index
    %c0_20 = arith.constant 0 : index
    %24 = vector.load %arg4[%c0_19, %c0_20] : memref<8x128xf32, #tpu.memory_space<vmem>>, vector<8x128xf32>
    tpu.vector_store %arg4[%c0_19, %c0_20], %23 {strides = array<i32>} : memref<8x128xf32, #tpu.memory_space<vmem>>, vector<8x128xf32>,
    return
  }
  func.func @transform_0(%arg0: i32) -> (i32, i32) {
    %c0_i32 = arith.constant 0 : i32
    %c0_i32_0 = arith.constant 0 : i32
    return %arg0, %c0_i32 : i32, i32
  }
  func.func @transform_1(%arg0: i32) -> (i32, i32, i32) {
    %c0_i32 = arith.constant 0 : i32
    %c0_i32_0 = arith.constant 0 : i32
    %c0_i32_1 = arith.constant 0 : i32
    %c0_i32_2 = arith.constant 0 : i32
    return %c0_i32, %c0_i32_0, %c0_i32_1 : i32, i32, i32
  }
  func.func @transform_2(%arg0: i32) -> (i32, i32, i32) {
    %c0_i32 = arith.constant 0 : i32
    %c0_i32_0 = arith.constant 0 : i32
    %c0_i32_1 = arith.constant 0 : i32
    %c0_i32_2 = arith.constant 0 : i32
    return %c0_i32, %c0_i32_0, %c0_i32_1 : i32, i32, i32
  }
  func.func @transform_3(%arg0: i32) -> (i32, i32) {
    %c0_i32 = arith.constant 0 : i32
    %c0_i32_0 = arith.constant 0 : i32
    return %arg0, %c0_i32 : i32, i32
  }
}

</mosaic_0001>

<llo_original>
// kernel: qnetwork_forward.1
$region0: #{qnetwork_forward.1}
  #allocation0 [shape = 'u32[]', space=smem, size = 0x4, offset = 0x4, fixed_abs, tag = 'smem constant byte address 0x4 - core index']
  #allocation1 [shape = 'u32[144,128]{1,0:T(1,128)}', space=vmem, size = 0x12000, scoped, tag = 'internal scratch']
  %s0 = inlined_call_operand.vmem [shape: f32[8,128], index: 0, kind: input, shape index: {}]
  %s1 = inlined_call_operand.hbm [shape: f32[3,128,128], index: 1, kind: input, shape index: {}]
  %s2 = inlined_call_operand.vmem [shape: f32[3,1,128], index: 2, kind: input, shape index: {}]
  %s3 = inlined_call_operand.vmem [shape: f32[8,128], index: 3, kind: output, shape index: {}]
  %s4 = sld [smem:[#allocation0]]
  $region26: #{qnetwork_forward.1} parent=0
    _
  %s6 = ssub.s32 1, %s4
  %s7 = scalar_select 0, %s6, %s4
  $region1: #{qnetwork_forward.1} parent=0
    #allocation2 [shape = 'u8[196608]{0}', space=vmem, size = 0x30000, scoped, tag = 'input window, operand 1, single buffered']
    #allocation3 [shape = 's32[1]{0}', space=sflag, size = 0x4, scoped, tag = 'scoped memory for qnetwork_forward.1']
    %8 = vsyncpa [#allocation3], 0
    // Predicated region
    $region2: #{qnetwork_forward.1} parent=1 // pred_check
      _
    $region3: #{qnetwork_forward.1} parent=1 // pred_check_branch
      %10 = sbr.rel (0) target = $region5
    $region4: #{qnetwork_forward.1} parent=1 // pred_region
      _
    $region5: #{qnetwork_forward.1} parent=1 // pred_fallthru
      _
    // Predicated region
    $region6: #{qnetwork_forward.1} parent=1 // pred_check
      _
    $region7: #{qnetwork_forward.1} parent=1 // pred_check_branch
      %12 = sbr.rel (0) target = $region9
    $region8: #{qnetwork_forward.1} parent=1 // pred_region
      %s14 = ssub.s32 6144, 6144
      %15 = vsyncadd [#allocation3], %s14
      %s16 = sshll.u32 [#allocation2], 4
      %s17 = int_to_ptr.vmem [resolvable:$true] %s16
      %22 = dma.hbm_to_vmem [thread:$0]  %s1, 6144, %s17, [#allocation3], 128, 128, 8
    $region9: #{qnetwork_forward.1} parent=1 // pred_fallthru
      _
    // Predicated region
    $region10: #{qnetwork_forward.1} parent=1 // pred_check
      _
    $region11: #{qnetwork_forward.1} parent=1 // pred_check_branch
      %24 = sbr.rel (0) target = $region13
    $region12: #{qnetwork_forward.1} parent=1 // pred_region
      _
    $region13: #{qnetwork_forward.1} parent=1 // pred_fallthru
      _
    // Predicated region
    $region14: #{qnetwork_forward.1} parent=1 // pred_check
      _
    $region15: #{qnetwork_forward.1} parent=1 // pred_check_branch
      %26 = sbr.rel (0) target = $region17
    $region16: #{qnetwork_forward.1} parent=1 // pred_region
      %27 = dma.done [#allocation3], 6144
    $region17: #{qnetwork_forward.1} parent=1 // pred_fallthru
      _
    %v28 = vld [vmem:[%s0] sm:$0xff]
    %v29 = vld [vmem:[#allocation2] sm:$0xff]
    %v30 = vld [vmem:[#allocation2 + $0x8] sm:$0xff]
    %v31 = vld [vmem:[#allocation2 + $0x10] sm:$0xff]
    %v32 = vld [vmem:[#allocation2 + $0x18] sm:$0xff]
    %v33 = vld [vmem:[#allocation2 + $0x20] sm:$0xff]
    %v34 = vld [vmem:[#allocation2 + $0x28] sm:$0xff]
    %v35 = vld [vmem:[#allocation2 + $0x30] sm:$0xff]
    %v36 = vld [vmem:[#allocation2 + $0x38] sm:$0xff]
    %v37 = vld [vmem:[#allocation2 + $0x40] sm:$0xff]
    %v38 = vld [vmem:[#allocation2 + $0x48] sm:$0xff]
    %v39 = vld [vmem:[#allocation2 + $0x50] sm:$0xff]
    %v40 = vld [vmem:[#allocation2 + $0x58] sm:$0xff]
    %v41 = vld [vmem:[#allocation2 + $0x60] sm:$0xff]
    %v42 = vld [vmem:[#allocation2 + $0x68] sm:$0xff]
    %v43 = vld [vmem:[#allocation2 + $0x70] sm:$0xff]
    %v44 = vld [vmem:[#allocation2 + $0x78] sm:$0xff]
    %v45 = vld [vmem:[%s2] sm:$0x1]
    %v47 = vlaneseq
    %v48 = vshrl.u32 %v47, 7
    %v49 = vsub.s32 0, %v48
    %v50 = vrot.slane %v45, %v49
    %52 = vmatprep.subr.mxu0 0.0
    %53 = vmatpush1.msra.mxu0 %v44
    %54 = vmatprep.subr.mxu0 0.0
    %55 = vmatpush1.msra.mxu0 %v43
    %56 = vmatprep.subr.mxu0 0.0
    %57 = vmatpush1.msra.mxu0 %v42
    %58 = vmatprep.subr.mxu0 0.0
    %59 = vmatpush1.msra.mxu0 %v41
    %60 = vmatprep.subr.mxu0 0.0
    %61 = vmatpush1.msra.mxu0 %v40
    %62 = vmatprep.subr.mxu0 0.0
    %63 = vmatpush1.msra.mxu0 %v39
    %64 = vmatprep.subr.mxu0 0.0
    %65 = vmatpush1.msra.mxu0 %v38
    %66 = vmatprep.subr.mxu0 0.0
    %67 = vmatpush1.msra.mxu0 %v37
    %68 = vmatprep.subr.mxu0 0.0
    %69 = vmatpush1.msra.mxu0 %v36
    %70 = vmatprep.subr.mxu0 0.0
    %71 = vmatpush1.msra.mxu0 %v35
    %72 = vmatprep.subr.mxu0 0.0
    %73 = vmatpush1.msra.mxu0 %v34
    %74 = vmatprep.subr.mxu0 0.0
    %75 = vmatpush1.msra.mxu0 %v33
    %76 = vmatprep.subr.mxu0 0.0
    %77 = vmatpush1.msra.mxu0 %v32
    %78 = vmatprep.subr.mxu0 0.0
    %79 = vmatpush1.msra.mxu0 %v31
    %80 = vmatprep.subr.mxu0 0.0
    %81 = vmatpush1.msra.mxu0 %v30
    %82 = vmatprep.subr.mxu0 0.0
    %83 = vmatpush1.msra.mxu0 %v29
    %84 = vmatprep.subr.mxu0 0.0
    %85 = vmatpush2.msra.mxu0 0.0
    %86 = vmatprep.subr.mxu0 0.0
    %87 = vmatpush2.msra.mxu0 0.0
    %88 = vmatprep.subr.mxu0 0.0
    %89 = vmatpush2.msra.mxu0 0.0
    %90 = vmatprep.subr.mxu0 0.0
    %91 = vmatpush2.msra.mxu0 0.0
    %92 = vmatprep.subr.mxu0 0.0
    %93 = vmatpush2.msra.mxu0 0.0
    %94 = vmatprep.subr.mxu0 0.0
    %95 = vmatpush2.msra.mxu0 0.0
    %96 = vmatprep.subr.mxu0 0.0
    %97 = vmatpush2.msra.mxu0 0.0
    %98 = vmatprep.subr.mxu0 0.0
    %99 = vmatpush2.msra.mxu0 0.0
    %100 = vmatprep.subr.mxu0 0.0
    %101 = vmatpush2.msra.mxu0 0.0
    %102 = vmatprep.subr.mxu0 0.0
    %103 = vmatpush2.msra.mxu0 0.0
    %104 = vmatprep.subr.mxu0 0.0
    %105 = vmatpush2.msra.mxu0 0.0
    %106 = vmatprep.subr.mxu0 0.0
    %107 = vmatpush2.msra.mxu0 0.0
    %108 = vmatprep.subr.mxu0 0.0
    %109 = vmatpush2.msra.mxu0 0.0
    %110 = vmatprep.subr.mxu0 0.0
    %111 = vmatpush2.msra.mxu0 0.0
    %112 = vmatprep.subr.mxu0 0.0
    %113 = vmatpush2.msra.mxu0 0.0
    %114 = vmatprep.subr.mxu0 0.0
    %115 = vmatpush2.msra.mxu0 0.0
    %116 = vmatprep.mubr.f32.mxu0 0.0
    %117 = vmatmul.mubr.f32.gmra.mxu0 %v28
    %v118 = vpop.f32.mrf.mxu0
    %v119 = vadd.f32 %v50, %v118
    %v120 = vpop.f32.mrf.mxu0
    %121 = vdwg.mxu0
    %v122 = vtanh.pop %v119
    %s123 = scalar_lea.vmem [#allocation2], 128
    %v124 = vld [vmem:[%s123] sm:$0xff]
    %v125 = vld [vmem:[%s123 + $0x8] sm:$0xff]
    %v126 = vld [vmem:[%s123 + $0x10] sm:$0xff]
    %v127 = vld [vmem:[%s123 + $0x18] sm:$0xff]
    %v128 = vld [vmem:[%s123 + $0x20] sm:$0xff]
    %v129 = vld [vmem:[%s123 + $0x28] sm:$0xff]
    %v130 = vld [vmem:[%s123 + $0x30] sm:$0xff]
    %v131 = vld [vmem:[%s123 + $0x38] sm:$0xff]
    %v132 = vld [vmem:[%s123 + $0x40] sm:$0xff]
    %v133 = vld [vmem:[%s123 + $0x48] sm:$0xff]
    %v134 = vld [vmem:[%s123 + $0x50] sm:$0xff]
    %v135 = vld [vmem:[%s123 + $0x58] sm:$0xff]
    %v136 = vld [vmem:[%s123 + $0x60] sm:$0xff]
    %v137 = vld [vmem:[%s123 + $0x68] sm:$0xff]
    %v138 = vld [vmem:[%s123 + $0x70] sm:$0xff]
    %v139 = vld [vmem:[%s123 + $0x78] sm:$0xff]
    %s140 = scalar_lea.vmem %s2, 1
    %v141 = vld [vmem:[%s140] sm:$0x1]
    %v143 = vlaneseq
    %v144 = vshrl.u32 %v143, 7
    %v145 = vsub.s32 0, %v144
    %v146 = vrot.slane %v141, %v145
    %148 = vmatprep.subr.mxu0 0.0
    %149 = vmatpush1.msra.mxu0 %v139
    %150 = vmatprep.subr.mxu0 0.0
    %151 = vmatpush1.msra.mxu0 %v138
    %152 = vmatprep.subr.mxu0 0.0
    %153 = vmatpush1.msra.mxu0 %v137
    %154 = vmatprep.subr.mxu0 0.0
    %155 = vmatpush1.msra.mxu0 %v136
    %156 = vmatprep.subr.mxu0 0.0
    %157 = vmatpush1.msra.mxu0 %v135
    %158 = vmatprep.subr.mxu0 0.0
    %159 = vmatpush1.msra.mxu0 %v134
    %160 = vmatprep.subr.mxu0 0.0
    %161 = vmatpush1.msra.mxu0 %v133
    %162 = vmatprep.subr.mxu0 0.0
    %163 = vmatpush1.msra.mxu0 %v132
    %164 = vmatprep.subr.mxu0 0.0
    %165 = vmatpush1.msra.mxu0 %v131
    %166 = vmatprep.subr.mxu0 0.0
    %167 = vmatpush1.msra.mxu0 %v130
    %168 = vmatprep.subr.mxu0 0.0
    %169 = vmatpush1.msra.mxu0 %v129
    %170 = vmatprep.subr.mxu0 0.0
    %171 = vmatpush1.msra.mxu0 %v128
    %172 = vmatprep.subr.mxu0 0.0
    %173 = vmatpush1.msra.mxu0 %v127
    %174 = vmatprep.subr.mxu0 0.0
    %175 = vmatpush1.msra.mxu0 %v126
    %176 = vmatprep.subr.mxu0 0.0
    %177 = vmatpush1.msra.mxu0 %v125
    %178 = vmatprep.subr.mxu0 0.0
    %179 = vmatpush1.msra.mxu0 %v124
    %180 = vmatprep.subr.mxu0 0.0
    %181 = vmatpush2.msra.mxu0 0.0
    %182 = vmatprep.subr.mxu0 0.0
    %183 = vmatpush2.msra.mxu0 0.0
    %184 = vmatprep.subr.mxu0 0.0
    %185 = vmatpush2.msra.mxu0 0.0
    %186 = vmatprep.subr.mxu0 0.0
    %187 = vmatpush2.msra.mxu0 0.0
    %188 = vmatprep.subr.mxu0 0.0
    %189 = vmatpush2.msra.mxu0 0.0
    %190 = vmatprep.subr.mxu0 0.0
    %191 = vmatpush2.msra.mxu0 0.0
    %192 = vmatprep.subr.mxu0 0.0
    %193 = vmatpush2.msra.mxu0 0.0
    %194 = vmatprep.subr.mxu0 0.0
    %195 = vmatpush2.msra.mxu0 0.0
    %196 = vmatprep.subr.mxu0 0.0
    %197 = vmatpush2.msra.mxu0 0.0
    %198 = vmatprep.subr.mxu0 0.0
    %199 = vmatpush2.msra.mxu0 0.0
    %200 = vmatprep.subr.mxu0 0.0
    %201 = vmatpush2.msra.mxu0 0.0
    %202 = vmatprep.subr.mxu0 0.0
    %203 = vmatpush2.msra.mxu0 0.0
    %204 = vmatprep.subr.mxu0 0.0
    %205 = vmatpush2.msra.mxu0 0.0
    %206 = vmatprep.subr.mxu0 0.0
    %207 = vmatpush2.msra.mxu0 0.0
    %208 = vmatprep.subr.mxu0 0.0
    %209 = vmatpush2.msra.mxu0 0.0
    %210 = vmatprep.subr.mxu0 0.0
    %211 = vmatpush2.msra.mxu0 0.0
    %212 = vmatprep.mubr.f32.mxu0 0.0
    %213 = vmatmul.mubr.f32.gmra.mxu0 %v122
    %v214 = vpop.f32.mrf.mxu0
    %v215 = vadd.f32 %v146, %v214
    %v216 = vpop.f32.mrf.mxu0
    %217 = vdwg.mxu0
    %v218 = vtanh.pop %v215
    %s219 = scalar_lea.vmem [#allocation2], 256
    %v220 = vld [vmem:[%s219] sm:$0xff]
    %v221 = vld [vmem:[%s219 + $0x8] sm:$0xff]
    %v222 = vld [vmem:[%s219 + $0x10] sm:$0xff]
    %v223 = vld [vmem:[%s219 + $0x18] sm:$0xff]
    %v224 = vld [vmem:[%s219 + $0x20] sm:$0xff]
    %v225 = vld [vmem:[%s219 + $0x28] sm:$0xff]
    %v226 = vld [vmem:[%s219 + $0x30] sm:$0xff]
    %v227 = vld [vmem:[%s219 + $0x38] sm:$0xff]
    %v228 = vld [vmem:[%s219 + $0x40] sm:$0xff]
    %v229 = vld [vmem:[%s219 + $0x48] sm:$0xff]
    %v230 = vld [vmem:[%s219 + $0x50] sm:$0xff]
    %v231 = vld [vmem:[%s219 + $0x58] sm:$0xff]
    %v232 = vld [vmem:[%s219 + $0x60] sm:$0xff]
    %v233 = vld [vmem:[%s219 + $0x68] sm:$0xff]
    %v234 = vld [vmem:[%s219 + $0x70] sm:$0xff]
    %v235 = vld [vmem:[%s219 + $0x78] sm:$0xff]
    %s236 = scalar_lea.vmem %s2, 2
    %v237 = vld [vmem:[%s236] sm:$0x1]
    %v239 = vlaneseq
    %v240 = vshrl.u32 %v239, 7
    %v241 = vsub.s32 0, %v240
    %v242 = vrot.slane %v237, %v241
    %244 = vmatprep.subr.mxu0 0.0
    %245 = vmatpush1.msra.mxu0 %v235
    %246 = vmatprep.subr.mxu0 0.0
    %247 = vmatpush1.msra.mxu0 %v234
    %248 = vmatprep.subr.mxu0 0.0
    %249 = vmatpush1.msra.mxu0 %v233
    %250 = vmatprep.subr.mxu0 0.0
    %251 = vmatpush1.msra.mxu0 %v232
    %252 = vmatprep.subr.mxu0 0.0
    %253 = vmatpush1.msra.mxu0 %v231
    %254 = vmatprep.subr.mxu0 0.0
    %255 = vmatpush1.msra.mxu0 %v230
    %256 = vmatprep.subr.mxu0 0.0
    %257 = vmatpush1.msra.mxu0 %v229
    %258 = vmatprep.subr.mxu0 0.0
    %259 = vmatpush1.msra.mxu0 %v228
    %260 = vmatprep.subr.mxu0 0.0
    %261 = vmatpush1.msra.mxu0 %v227
    %262 = vmatprep.subr.mxu0 0.0
    %263 = vmatpush1.msra.mxu0 %v226
    %264 = vmatprep.subr.mxu0 0.0
    %265 = vmatpush1.msra.mxu0 %v225
    %266 = vmatprep.subr.mxu0 0.0
    %267 = vmatpush1.msra.mxu0 %v224
    %268 = vmatprep.subr.mxu0 0.0
    %269 = vmatpush1.msra.mxu0 %v223
    %270 = vmatprep.subr.mxu0 0.0
    %271 = vmatpush1.msra.mxu0 %v222
    %272 = vmatprep.subr.mxu0 0.0
    %273 = vmatpush1.msra.mxu0 %v221
    %274 = vmatprep.subr.mxu0 0.0
    %275 = vmatpush1.msra.mxu0 %v220
    %276 = vmatprep.subr.mxu0 0.0
    %277 = vmatpush2.msra.mxu0 0.0
    %278 = vmatprep.subr.mxu0 0.0
    %279 = vmatpush2.msra.mxu0 0.0
    %280 = vmatprep.subr.mxu0 0.0
    %281 = vmatpush2.msra.mxu0 0.0
    %282 = vmatprep.subr.mxu0 0.0
    %283 = vmatpush2.msra.mxu0 0.0
    %284 = vmatprep.subr.mxu0 0.0
    %285 = vmatpush2.msra.mxu0 0.0
    %286 = vmatprep.subr.mxu0 0.0
    %287 = vmatpush2.msra.mxu0 0.0
    %288 = vmatprep.subr.mxu0 0.0
    %289 = vmatpush2.msra.mxu0 0.0
    %290 = vmatprep.subr.mxu0 0.0
    %291 = vmatpush2.msra.mxu0 0.0
    %292 = vmatprep.subr.mxu0 0.0
    %293 = vmatpush2.msra.mxu0 0.0
    %294 = vmatprep.subr.mxu0 0.0
    %295 = vmatpush2.msra.mxu0 0.0
    %296 = vmatprep.subr.mxu0 0.0
    %297 = vmatpush2.msra.mxu0 0.0
    %298 = vmatprep.subr.mxu0 0.0
    %299 = vmatpush2.msra.mxu0 0.0
    %300 = vmatprep.subr.mxu0 0.0
    %301 = vmatpush2.msra.mxu0 0.0
    %302 = vmatprep.subr.mxu0 0.0
    %303 = vmatpush2.msra.mxu0 0.0
    %304 = vmatprep.subr.mxu0 0.0
    %305 = vmatpush2.msra.mxu0 0.0
    %306 = vmatprep.subr.mxu0 0.0
    %307 = vmatpush2.msra.mxu0 0.0
    %308 = vmatprep.mubr.f32.mxu0 0.0
    %309 = vmatmul.mubr.f32.gmra.mxu0 %v218
    %v310 = vpop.f32.mrf.mxu0
    %v311 = vadd.f32 %v242, %v310
    %v312 = vpop.f32.mrf.mxu0
    %313 = vdwg.mxu0
    %314 = vst [vmem:[%s3] sm:$0xff] %v311
    // Predicated region
    $region18: #{qnetwork_forward.1} parent=1 // pred_check
      _
    $region19: #{qnetwork_forward.1} parent=1 // pred_check_branch
      %316 = sbr.rel (0) target = $region21
    $region20: #{qnetwork_forward.1} parent=1 // pred_region
      _
    $region21: #{qnetwork_forward.1} parent=1 // pred_fallthru
      _
    // Predicated region
    $region22: #{qnetwork_forward.1} parent=1 // pred_check
      _
    $region23: #{qnetwork_forward.1} parent=1 // pred_check_branch
      %318 = sbr.rel (0) target = $region25
    $region24: #{qnetwork_forward.1} parent=1 // pred_region
      _
    $region25: #{qnetwork_forward.1} parent=1 // pred_fallthru
      _
    %319 = vsyncpa [#allocation3], 1

</llo_original>
